<compile_context>
chip_gen: v7x
topology: tpu7x:2x2x1
jax: 0.10.0
libtpu: 0.0.40
codegen_flags: <defaults>
</compile_context>

<pallas_src>
import jax
import jax.numpy as jnp
from jax.experimental import pallas as pl
from jax.experimental.pallas import tpu as pltpu


def _round_up(x, m):
    return ((x + m - 1) // m) * m


def _gelu_tanh(x):
    # tanh-approximate GELU, elementwise in f32 (EUP handles the tanh).
    c = jnp.sqrt(2.0 / jnp.pi).astype(x.dtype)
    return 0.5 * x * (1.0 + jnp.tanh(c * (x + 0.044715 * x * x * x)))


def residual_ff_kernel(x_ref, w1_ref, b1_ref, w2_ref, b2_ref, o_ref):
    """o = (GELU(x @ W1 + b1) @ W2 + b2) + x   for one (TM, Dp) token tile."""
    x = x_ref[...]                                            # (TM, Dp), native dtype
    xm = x if x.dtype == w1_ref.dtype else x.astype(w1_ref.dtype)
    h = jnp.dot(xm, w1_ref[...], preferred_element_type=jnp.float32)
    h = _gelu_tanh(h + b1_ref[...])                           # (TM, Hp) f32
    hm = h if h.dtype == w2_ref.dtype else h.astype(w2_ref.dtype)
    y = jnp.dot(hm, w2_ref[...], preferred_element_type=jnp.float32)
    xf = x if x.dtype == jnp.float32 else x.astype(jnp.float32)
    o_ref[...] = (y + b2_ref[...] + xf).astype(o_ref.dtype)   # residual add in f32


def residual_feedforward(x, w1, b1, w2, b2, *, tm=256, matmul_dtype=None):
    """x: (B, N, D).  Returns fn(x) + x with fn = Linear -> GELU -> Linear.

    tm:           token (row) tile; 256 fills the v6e/v7x MXU, clamped for tiny inputs.
    matmul_dtype: e.g. jnp.bfloat16 to run the MXU in bf16 (f32 accumulation).
    """
    B, N, D = x.shape
    H = w1.shape[1]
    assert w1.shape == (D, H) and w2.shape == (H, D)
    assert b1.shape == (H,) and b2.shape == (D,)
    M = B * N

    # Lane-dense / sublane-aligned padded sizes.
    Dp = _round_up(D, 128)
    Hp = _round_up(H, 128)
    tm = max(8, min(tm, _round_up(M, 8)))
    Mp = _round_up(M, tm)

    md = jnp.dtype(matmul_dtype) if matmul_dtype is not None else jnp.dtype(jnp.float32)

    def pad2(a, r, c):
        return a if (r == a.shape[0] and c == a.shape[1]) else jnp.pad(
            a, ((0, r - a.shape[0]), (0, c - a.shape[1])))

    # Zero-padding keeps the padded lanes zero through the whole MLP (zero W
    # rows/cols, zero biases), so they are simply sliced off afterwards.
    x2 = pad2(x.reshape(M, D), Mp, Dp)
    w1p = pad2(w1, Dp, Hp).astype(md)
    w2p = pad2(w2, Hp, Dp).astype(md)
    b1p = pad2(b1.astype(jnp.float32).reshape(1, H), 1, Hp)
    b2p = pad2(b2.astype(jnp.float32).reshape(1, D), 1, Dp)

    # Explicit VMEM budget: resident weights + double-buffered x/out tiles +
    # the f32 hidden activation, with 2x headroom; clamped to [32, 56] MiB so
    # it is legal on v5e/v6e (128 MiB) and v7x (64 MiB physical).
    wbytes = (w1p.size + w2p.size) * md.itemsize + (b1p.size + b2p.size) * 4
    abytes = 2 * 2 * tm * Dp * max(4, x2.dtype.itemsize) + tm * Hp * 4
    vmem_limit = int(min(max(2 * (wbytes + abytes), 32 << 20), 56 << 20))

    def build(resident_weights):
        # Weights/biases have a constant block index -> multi-buffering buys
        # nothing; keep a single resident copy when the build supports it.
        wkw = {"pipeline_mode": pl.Buffered(1)} if resident_weights else {}
        return pl.pallas_call(
            residual_ff_kernel,
            out_shape=jax.ShapeDtypeStruct((Mp, Dp), x.dtype),
            grid_spec=pltpu.PrefetchScalarGridSpec(
                num_scalar_prefetch=0,
                grid=(Mp // tm,),
                in_specs=[
                    pl.BlockSpec((tm, Dp), lambda i: (i, 0)),          # x row tile
                    pl.BlockSpec((Dp, Hp), lambda i: (0, 0), **wkw),   # W1 (resident)
                    pl.BlockSpec((1, Hp), lambda i: (0, 0), **wkw),    # b1
                    pl.BlockSpec((Hp, Dp), lambda i: (0, 0), **wkw),   # W2 (resident)
                    pl.BlockSpec((1, Dp), lambda i: (0, 0), **wkw),    # b2
                ],
                out_specs=pl.BlockSpec((tm, Dp), lambda i: (i, 0)),
            ),
            compiler_params=pltpu.CompilerParams(
                dimension_semantics=("parallel",),   # shard row tiles across TCs (v7x)
                vmem_limit_bytes=vmem_limit),
        )

    try:
        out = jax.block_until_ready(build(True)(x2, w1p, b1p, w2p, b2p))
    except Exception:
        # Fallback if this JAX build rejects Buffered(1) on pallas_call specs.
        out = build(False)(x2, w1p, b1p, w2p, b2p)

    return out[:M, :D].reshape(B, N, D)


def residual_feedforward_ref(x, w1, b1, w2, b2):
    h = _gelu_tanh(x @ w1 + b1)
    return h @ w2 + b2 + x


def _make_inputs(key, B, N, D, H):
    kx, k1, k2, k3, k4 = jax.random.split(key, 5)
    x = jax.random.normal(kx, (B, N, D), dtype=jnp.float32)
    w1 = jax.random.normal(k1, (D, H), dtype=jnp.float32) * 0.05
    b1 = jax.random.normal(k2, (H,), dtype=jnp.float32) * 0.01
    w2 = jax.random.normal(k3, (H, D), dtype=jnp.float32) * 0.05
    b2 = jax.random.normal(k4, (D,), dtype=jnp.float32) * 0.01
    return x, w1, b1, w2, b2


if __name__ == "__main__":
    root = jax.random.PRNGKey(0)
    k0, k1, k2 = jax.random.split(root, 3)

    # Case 1: small lane-dense ViT-like shapes (D, H multiples of 128).
    x, w1, b1, w2, b2 = _make_inputs(k0, 2, 16, 128, 256)
    out = jax.block_until_ready(residual_feedforward(x, w1, b1, w2, b2))
    ref = residual_feedforward_ref(x, w1, b1, w2, b2)
    assert out.shape == x.shape and out.dtype == x.dtype
    assert jnp.allclose(out, ref, atol=2e-2, rtol=2e-2), "mismatch vs reference (f32)"

    # Case 2: ragged toy shapes exercising the pad-to-(8,128) wrapper path.
    x, w1, b1, w2, b2 = _make_inputs(k1, 2, 8, 32, 64)
    out = jax.block_until_ready(residual_feedforward(x, w1, b1, w2, b2))
    ref = residual_feedforward_ref(x, w1, b1, w2, b2)
    assert out.shape == x.shape
    assert jnp.allclose(out, ref, atol=2e-2, rtol=2e-2), "mismatch vs reference (padded)"

    # Case 3: bf16 MXU path (bf16 matmul operands, f32 accumulation + residual).
    x, w1, b1, w2, b2 = _make_inputs(k2, 2, 16, 128, 256)
    out = jax.block_until_ready(
        residual_feedforward(x, w1, b1, w2, b2, matmul_dtype=jnp.bfloat16))
    ref = residual_feedforward_ref(x, w1, b1, w2, b2)
    assert jnp.allclose(out, ref, atol=1e-1, rtol=1e-1), "mismatch vs reference (bf16)"

    print("KERNEL_OK")
</pallas_src>

<mosaic_0001>
module attributes {stable_mosaic.version = 11 : i64} {
  func.func @residual_ff_kernel(%arg0: i32, %arg1: memref<32x128xf32, #tpu.memory_space<vmem>>, %arg2: memref<128x256xf32, #tpu.memory_space<vmem>>, %arg3: memref<1x256xf32, #tpu.memory_space<vmem>>, %arg4: memref<256x128xf32, #tpu.memory_space<vmem>>, %arg5: memref<1x128xf32, #tpu.memory_space<vmem>>, %arg6: memref<32x128xf32, #tpu.memory_space<vmem>>) attributes {dimension_semantics = [#tpu.dimension_semantics<parallel>], iteration_bounds = array<i64: 1>, scalar_prefetch = 0 : i64, scratch_operands = 0 : i64, tpu.core_type = #tpu.core_type<tc>, window_params = [{transform_indices = @transform_0, window_bounds = array<i64: 32, 128>}, {pipeline_mode = #tpu.pipeline_mode<synchronous>, transform_indices = @transform_1, window_bounds = array<i64: 128, 256>}, {pipeline_mode = #tpu.pipeline_mode<synchronous>, transform_indices = @transform_2, window_bounds = array<i64: 1, 256>}, {pipeline_mode = #tpu.pipeline_mode<synchronous>, transform_indices = @transform_3, window_bounds = array<i64: 256, 128>}, {pipeline_mode = #tpu.pipeline_mode<synchronous>, transform_indices = @transform_4, window_bounds = array<i64: 1, 128>}, {transform_indices = @transform_5, window_bounds = array<i64: 32, 128>}]} {
    %c0 = arith.constant 0 : index
    %c0_0 = arith.constant 0 : index
    %0 = vector.load %arg1[%c0, %c0_0] : memref<32x128xf32, #tpu.memory_space<vmem>>, vector<32x128xf32>
    %c0_1 = arith.constant 0 : index
    %c0_2 = arith.constant 0 : index
    %1 = vector.load %arg2[%c0_1, %c0_2] : memref<128x256xf32, #tpu.memory_space<vmem>>, vector<128x256xf32>
    %cst = arith.constant dense<0.000000e+00> : vector<32x256xf32>
    %2 = tpu.matmul %0, %1, %cst {dimension_numbers = #tpu.dot_dimension_numbers<[1], [0], [0], [1], [0, 0, 1, 1], [], []>} : vector<32x128xf32>, vector<128x256xf32>, vector<32x256xf32> -> vector<32x256xf32>
    %c0_3 = arith.constant 0 : index
    %c0_4 = arith.constant 0 : index
    %3 = vector.load %arg3[%c0_3, %c0_4] : memref<1x256xf32, #tpu.memory_space<vmem>>, vector<1x256xf32>
    %4 = vector.broadcast %3 : vector<1x256xf32> to vector<32x256xf32>
    %5 = arith.addf %2, %4 : vector<32x256xf32>
    %cst_5 = arith.constant 0.636619746 : f32
    %6 = math.sqrt %cst_5 : f32
    %cst_6 = arith.constant 5.000000e-01 : f32
    %7 = vector.broadcast %cst_6 : f32 to vector<32x256xf32>
    %8 = arith.mulf %7, %5 : vector<32x256xf32>
    %cst_7 = arith.constant 4.471500e-02 : f32
    %9 = vector.broadcast %cst_7 : f32 to vector<32x256xf32>
    %10 = arith.mulf %9, %5 : vector<32x256xf32>
    %11 = arith.mulf %10, %5 : vector<32x256xf32>
    %12 = arith.mulf %11, %5 : vector<32x256xf32>
    %13 = arith.addf %5, %12 : vector<32x256xf32>
    %14 = vector.broadcast %6 : f32 to vector<32x256xf32>
    %15 = arith.mulf %14, %13 : vector<32x256xf32>
    %16 = math.tanh %15 : vector<32x256xf32>
    %cst_8 = arith.constant 1.000000e+00 : f32
    %17 = vector.broadcast %cst_8 : f32 to vector<32x256xf32>
    %18 = arith.addf %17, %16 : vector<32x256xf32>
    %19 = arith.mulf %8, %18 : vector<32x256xf32>
    %c0_9 = arith.constant 0 : index
    %c0_10 = arith.constant 0 : index
    %20 = vector.load %arg4[%c0_9, %c0_10] : memref<256x128xf32, #tpu.memory_space<vmem>>, vector<256x128xf32>
    %cst_11 = arith.constant dense<0.000000e+00> : vector<32x128xf32>
    %21 = tpu.matmul %19, %20, %cst_11 {dimension_numbers = #tpu.dot_dimension_numbers<[1], [0], [0], [1], [0, 0, 1, 1], [], []>} : vector<32x256xf32>, vector<256x128xf32>, vector<32x128xf32> -> vector<32x128xf32>
    %c0_12 = arith.constant 0 : index
    %c0_13 = arith.constant 0 : index
    %22 = vector.load %arg5[%c0_12, %c0_13] : memref<1x128xf32, #tpu.memory_space<vmem>>, vector<1x128xf32>
    %23 = vector.broadcast %22 : vector<1x128xf32> to vector<32x128xf32>
    %24 = arith.addf %21, %23 : vector<32x128xf32>
    %25 = arith.addf %24, %0 : vector<32x128xf32>
    %c0_14 = arith.constant 0 : index
    %c0_15 = arith.constant 0 : index
    %26 = vector.load %arg6[%c0_14, %c0_15] : memref<32x128xf32, #tpu.memory_space<vmem>>, vector<32x128xf32>
    tpu.vector_store %arg6[%c0_14, %c0_15], %25 {strides = array<i32>} : memref<32x128xf32, #tpu.memory_space<vmem>>, vector<32x128xf32>,
    return
  }
  func.func @transform_0(%arg0: i32) -> (i32, i32) {
    %c0_i32 = arith.constant 0 : i32
    %c0_i32_0 = arith.constant 0 : i32
    return %arg0, %c0_i32 : i32, i32
  }
  func.func @transform_1(%arg0: i32) -> (i32, i32) {
    %c0_i32 = arith.constant 0 : i32
    %c0_i32_0 = arith.constant 0 : i32
    %c0_i32_1 = arith.constant 0 : i32
    return %c0_i32, %c0_i32_0 : i32, i32
  }
  func.func @transform_2(%arg0: i32) -> (i32, i32) {
    %c0_i32 = arith.constant 0 : i32
    %c0_i32_0 = arith.constant 0 : i32
    %c0_i32_1 = arith.constant 0 : i32
    return %c0_i32, %c0_i32_0 : i32, i32
  }
  func.func @transform_3(%arg0: i32) -> (i32, i32) {
    %c0_i32 = arith.constant 0 : i32
    %c0_i32_0 = arith.constant 0 : i32
    %c0_i32_1 = arith.constant 0 : i32
    return %c0_i32, %c0_i32_0 : i32, i32
  }
  func.func @transform_4(%arg0: i32) -> (i32, i32) {
    %c0_i32 = arith.constant 0 : i32
    %c0_i32_0 = arith.constant 0 : i32
    %c0_i32_1 = arith.constant 0 : i32
    return %c0_i32, %c0_i32_0 : i32, i32
  }
  func.func @transform_5(%arg0: i32) -> (i32, i32) {
    %c0_i32 = arith.constant 0 : i32
    %c0_i32_0 = arith.constant 0 : i32
    return %arg0, %c0_i32 : i32, i32
  }
}

module attributes {stable_mosaic.version = 11 : i64} {
  func.func @residual_ff_kernel(%arg0: i32, %arg1: memref<32x128xf32, #tpu.memory_space<vmem>>, %arg2: memref<128x256xf32, #tpu.memory_space<vmem>>, %arg3: memref<1x256xf32, #tpu.memory_space<vmem>>, %arg4: memref<256x128xf32, #tpu.memory_space<vmem>>, %arg5: memref<1x128xf32, #tpu.memory_space<vmem>>, %arg6: memref<32x128xf32, #tpu.memory_space<vmem>>) attributes {dimension_semantics = [#tpu.dimension_semantics<parallel>], iteration_bounds = array<i64: 1>, scalar_prefetch = 0 : i64, scratch_operands = 0 : i64, tpu.core_type = #tpu.core_type<tc>, window_params = [{transform_indices = @transform_0, window_bounds = array<i64: 32, 128>}, {pipeline_mode = #tpu.pipeline_mode<synchronous>, transform_indices = @transform_1, window_bounds = array<i64: 128, 256>}, {pipeline_mode = #tpu.pipeline_mode<synchronous>, transform_indices = @transform_2, window_bounds = array<i64: 1, 256>}, {pipeline_mode = #tpu.pipeline_mode<synchronous>, transform_indices = @transform_3, window_bounds = array<i64: 256, 128>}, {pipeline_mode = #tpu.pipeline_mode<synchronous>, transform_indices = @transform_4, window_bounds = array<i64: 1, 128>}, {transform_indices = @transform_5, window_bounds = array<i64: 32, 128>}]} {
    %c0 = arith.constant 0 : index
    %c0_0 = arith.constant 0 : index
    %0 = vector.load %arg1[%c0, %c0_0] : memref<32x128xf32, #tpu.memory_space<vmem>>, vector<32x128xf32>
    %c0_1 = arith.constant 0 : index
    %c0_2 = arith.constant 0 : index
    %1 = vector.load %arg2[%c0_1, %c0_2] : memref<128x256xf32, #tpu.memory_space<vmem>>, vector<128x256xf32>
    %cst = arith.constant dense<0.000000e+00> : vector<32x256xf32>
    %2 = tpu.matmul %0, %1, %cst {dimension_numbers = #tpu.dot_dimension_numbers<[1], [0], [0], [1], [0, 0, 1, 1], [], []>} : vector<32x128xf32>, vector<128x256xf32>, vector<32x256xf32> -> vector<32x256xf32>
    %c0_3 = arith.constant 0 : index
    %c0_4 = arith.constant 0 : index
    %3 = vector.load %arg3[%c0_3, %c0_4] : memref<1x256xf32, #tpu.memory_space<vmem>>, vector<1x256xf32>
    %4 = vector.broadcast %3 : vector<1x256xf32> to vector<32x256xf32>
    %5 = arith.addf %2, %4 : vector<32x256xf32>
    %cst_5 = arith.constant 0.636619746 : f32
    %6 = math.sqrt %cst_5 : f32
    %cst_6 = arith.constant 5.000000e-01 : f32
    %7 = vector.broadcast %cst_6 : f32 to vector<32x256xf32>
    %8 = arith.mulf %7, %5 : vector<32x256xf32>
    %cst_7 = arith.constant 4.471500e-02 : f32
    %9 = vector.broadcast %cst_7 : f32 to vector<32x256xf32>
    %10 = arith.mulf %9, %5 : vector<32x256xf32>
    %11 = arith.mulf %10, %5 : vector<32x256xf32>
    %12 = arith.mulf %11, %5 : vector<32x256xf32>
    %13 = arith.addf %5, %12 : vector<32x256xf32>
    %14 = vector.broadcast %6 : f32 to vector<32x256xf32>
    %15 = arith.mulf %14, %13 : vector<32x256xf32>
    %16 = math.tanh %15 : vector<32x256xf32>
    %cst_8 = arith.constant 1.000000e+00 : f32
    %17 = vector.broadcast %cst_8 : f32 to vector<32x256xf32>
    %18 = arith.addf %17, %16 : vector<32x256xf32>
    %19 = arith.mulf %8, %18 : vector<32x256xf32>
    %c0_9 = arith.constant 0 : index
    %c0_10 = arith.constant 0 : index
    %20 = vector.load %arg4[%c0_9, %c0_10] : memref<256x128xf32, #tpu.memory_space<vmem>>, vector<256x128xf32>
    %cst_11 = arith.constant dense<0.000000e+00> : vector<32x128xf32>
    %21 = tpu.matmul %19, %20, %cst_11 {dimension_numbers = #tpu.dot_dimension_numbers<[1], [0], [0], [1], [0, 0, 1, 1], [], []>} : vector<32x256xf32>, vector<256x128xf32>, vector<32x128xf32> -> vector<32x128xf32>
    %c0_12 = arith.constant 0 : index
    %c0_13 = arith.constant 0 : index
    %22 = vector.load %arg5[%c0_12, %c0_13] : memref<1x128xf32, #tpu.memory_space<vmem>>, vector<1x128xf32>
    %23 = vector.broadcast %22 : vector<1x128xf32> to vector<32x128xf32>
    %24 = arith.addf %21, %23 : vector<32x128xf32>
    %25 = arith.addf %24, %0 : vector<32x128xf32>
    %c0_14 = arith.constant 0 : index
    %c0_15 = arith.constant 0 : index
    %26 = vector.load %arg6[%c0_14, %c0_15] : memref<32x128xf32, #tpu.memory_space<vmem>>, vector<32x128xf32>
    tpu.vector_store %arg6[%c0_14, %c0_15], %25 {strides = array<i32>} : memref<32x128xf32, #tpu.memory_space<vmem>>, vector<32x128xf32>,
    return
  }
  func.func @transform_0(%arg0: i32) -> (i32, i32) {
    %c0_i32 = arith.constant 0 : i32
    %c0_i32_0 = arith.constant 0 : i32
    return %arg0, %c0_i32 : i32, i32
  }
  func.func @transform_1(%arg0: i32) -> (i32, i32) {
    %c0_i32 = arith.constant 0 : i32
    %c0_i32_0 = arith.constant 0 : i32
    %c0_i32_1 = arith.constant 0 : i32
    return %c0_i32, %c0_i32_0 : i32, i32
  }
  func.func @transform_2(%arg0: i32) -> (i32, i32) {
    %c0_i32 = arith.constant 0 : i32
    %c0_i32_0 = arith.constant 0 : i32
    %c0_i32_1 = arith.constant 0 : i32
    return %c0_i32, %c0_i32_0 : i32, i32
  }
  func.func @transform_3(%arg0: i32) -> (i32, i32) {
    %c0_i32 = arith.constant 0 : i32
    %c0_i32_0 = arith.constant 0 : i32
    %c0_i32_1 = arith.constant 0 : i32
    return %c0_i32, %c0_i32_0 : i32, i32
  }
  func.func @transform_4(%arg0: i32) -> (i32, i32) {
    %c0_i32 = arith.constant 0 : i32
    %c0_i32_0 = arith.constant 0 : i32
    %c0_i32_1 = arith.constant 0 : i32
    return %c0_i32, %c0_i32_0 : i32, i32
  }
  func.func @transform_5(%arg0: i32) -> (i32, i32) {
    %c0_i32 = arith.constant 0 : i32
    %c0_i32_0 = arith.constant 0 : i32
    return %arg0, %c0_i32 : i32, i32
  }
}

</mosaic_0001>

<llo_original>
// kernel: tpu_custom_call.1
$region0: #{tpu_custom_call.1}
  #allocation0 [shape = 'u32[]', space=smem, size = 0x4, offset = 0x4, fixed_abs, tag = 'smem constant byte address 0x4 - core index']
  #allocation1 [shape = 'u32[144,128]{1,0:T(1,128)}', space=vmem, size = 0x12000, scoped, tag = 'internal scratch']
  %s0 = inlined_call_operand.hbm [shape: f32[32,128], index: 0, kind: input, shape index: {}]
  %s1 = inlined_call_operand.hbm [shape: f32[128,256], index: 1, kind: input, shape index: {}]
  %s2 = inlined_call_operand.vmem [shape: f32[1,256], index: 2, kind: input, shape index: {}]
  %s3 = inlined_call_operand.hbm [shape: f32[256,128], index: 3, kind: input, shape index: {}]
  %s4 = inlined_call_operand.vmem [shape: f32[1,128], index: 4, kind: input, shape index: {}]
  %s5 = inlined_call_operand.hbm [shape: f32[32,128], index: 5, kind: output, shape index: {}]
  %s6 = sld [smem:[#allocation0]]
  $region42: #{tpu_custom_call.1} parent=0
    _
  %s8 = ssub.s32 1, %s6
  %s9 = scalar_select 0, %s8, %s6
  $region1: #{tpu_custom_call.1} parent=0
    #allocation2 [shape = 'u8[16384]{0}', space=vmem, size = 0x4000, scoped, tag = 'input window, operand 0, single buffered']
    #allocation3 [shape = 's32[1]{0}', space=sflag, size = 0x4, scoped, tag = 'scoped memory for tpu_custom_call.1']
    #allocation4 [shape = 's32[1]{0}', space=sflag, size = 0x4, scoped, tag = 'scoped memory for tpu_custom_call.1']
    #allocation5 [shape = 'u8[131072]{0}', space=vmem, size = 0x20000, scoped, tag = 'input window, operand 1, single buffered']
    #allocation6 [shape = 's32[1]{0}', space=sflag, size = 0x4, scoped, tag = 'scoped memory for tpu_custom_call.1']
    #allocation7 [shape = 'u8[131072]{0}', space=vmem, size = 0x20000, scoped, tag = 'input window, operand 3, single buffered']
    #allocation8 [shape = 'u8[16384]{0}', space=vmem, size = 0x4000, scoped, tag = 'output window, operand 0, single buffered']
    %10 = vsyncpa [#allocation3], 0
    %11 = vsyncpa [#allocation6], 0
    %12 = vsyncpa [#allocation4], 0
    // Predicated region
    $region2: #{tpu_custom_call.1} parent=1 // pred_check
      _
    $region3: #{tpu_custom_call.1} parent=1 // pred_check_branch
      %14 = sbr.rel (0) target = $region5
    $region4: #{tpu_custom_call.1} parent=1 // pred_region
      %s16 = ssub.s32 512, 512
      %17 = vsyncadd [#allocation3], %s16
      %s18 = sshll.u32 [#allocation2], 4
      %s19 = int_to_ptr.vmem [resolvable:$true] %s18
      %24 = dma.hbm_to_vmem [thread:$0]  %s0, 512, %s19, [#allocation3], 128, 128, 8
    $region5: #{tpu_custom_call.1} parent=1 // pred_fallthru
      _
    // Predicated region
    $region6: #{tpu_custom_call.1} parent=1 // pred_check
      _
    $region7: #{tpu_custom_call.1} parent=1 // pred_check_branch
      %26 = sbr.rel (0) target = $region9
    $region8: #{tpu_custom_call.1} parent=1 // pred_region
      %s28 = ssub.s32 4096, 4096
      %29 = vsyncadd [#allocation6], %s28
      %s30 = sshll.u32 [#allocation5], 4
      %s31 = int_to_ptr.vmem [resolvable:$true] %s30
      %36 = dma.hbm_to_vmem [thread:$0]  %s1, 4096, %s31, [#allocation6], 256, 256, 16
    $region9: #{tpu_custom_call.1} parent=1 // pred_fallthru
      _
    // Predicated region
    $region10: #{tpu_custom_call.1} parent=1 // pred_check
      _
    $region11: #{tpu_custom_call.1} parent=1 // pred_check_branch
      %38 = sbr.rel (0) target = $region13
    $region12: #{tpu_custom_call.1} parent=1 // pred_region
      _
    $region13: #{tpu_custom_call.1} parent=1 // pred_fallthru
      _
    // Predicated region
    $region14: #{tpu_custom_call.1} parent=1 // pred_check
      _
    $region15: #{tpu_custom_call.1} parent=1 // pred_check_branch
      %40 = sbr.rel (0) target = $region17
    $region16: #{tpu_custom_call.1} parent=1 // pred_region
      %s42 = ssub.s32 4096, 4096
      %43 = vsyncadd [#allocation6], %s42
      %s44 = sshll.u32 [#allocation7], 4
      %s45 = int_to_ptr.vmem [resolvable:$true] %s44
      %50 = dma.hbm_to_vmem [thread:$0]  %s3, 4096, %s45, [#allocation6], 128, 128, 8
    $region17: #{tpu_custom_call.1} parent=1 // pred_fallthru
      _
    // Predicated region
    $region18: #{tpu_custom_call.1} parent=1 // pred_check
      _
    $region19: #{tpu_custom_call.1} parent=1 // pred_check_branch
      %52 = sbr.rel (0) target = $region21
    $region20: #{tpu_custom_call.1} parent=1 // pred_region
      _
    $region21: #{tpu_custom_call.1} parent=1 // pred_fallthru
      _
    // Predicated region
    $region22: #{tpu_custom_call.1} parent=1 // pred_check
      _
    $region23: #{tpu_custom_call.1} parent=1 // pred_check_branch
      %54 = sbr.rel (0) target = $region25
    $region24: #{tpu_custom_call.1} parent=1 // pred_region
      %55 = dma.done [#allocation3], 512
    $region25: #{tpu_custom_call.1} parent=1 // pred_fallthru
      _
    // Predicated region
    $region26: #{tpu_custom_call.1} parent=1 // pred_check
      _
    $region27: #{tpu_custom_call.1} parent=1 // pred_check_branch
      %57 = sbr.rel (0) target = $region29
    $region28: #{tpu_custom_call.1} parent=1 // pred_region
      %58 = dma.done [#allocation6], 4096
    $region29: #{tpu_custom_call.1} parent=1 // pred_fallthru
      _
    // Predicated region
    $region30: #{tpu_custom_call.1} parent=1 // pred_check
      _
    $region31: #{tpu_custom_call.1} parent=1 // pred_check_branch
      %60 = sbr.rel (0) target = $region33
    $region32: #{tpu_custom_call.1} parent=1 // pred_region
      %61 = dma.done [#allocation6], 4096
    $region33: #{tpu_custom_call.1} parent=1 // pred_fallthru
      _
    %v62 = vld [vmem:[#allocation2] sm:$0xff]
    %v63 = vld [vmem:[#allocation2 + $0x8] sm:$0xff]
    %v64 = vld [vmem:[#allocation2 + $0x10] sm:$0xff]
    %v65 = vld [vmem:[#allocation2 + $0x18] sm:$0xff]
    %v66 = vld [vmem:[#allocation5] sm:$0xff]
    %v67 = vld [vmem:[#allocation5 + $0x8] sm:$0xff]
    %v68 = vld [vmem:[#allocation5 + $0x10] sm:$0xff]
    %v69 = vld [vmem:[#allocation5 + $0x18] sm:$0xff]
    %v70 = vld [vmem:[#allocation5 + $0x20] sm:$0xff]
    %v71 = vld [vmem:[#allocation5 + $0x28] sm:$0xff]
    %v72 = vld [vmem:[#allocation5 + $0x30] sm:$0xff]
    %v73 = vld [vmem:[#allocation5 + $0x38] sm:$0xff]
    %v74 = vld [vmem:[#allocation5 + $0x40] sm:$0xff]
    %v75 = vld [vmem:[#allocation5 + $0x48] sm:$0xff]
    %v76 = vld [vmem:[#allocation5 + $0x50] sm:$0xff]
    %v77 = vld [vmem:[#allocation5 + $0x58] sm:$0xff]
    %v78 = vld [vmem:[#allocation5 + $0x60] sm:$0xff]
    %v79 = vld [vmem:[#allocation5 + $0x68] sm:$0xff]
    %v80 = vld [vmem:[#allocation5 + $0x70] sm:$0xff]
    %v81 = vld [vmem:[#allocation5 + $0x78] sm:$0xff]
    %v82 = vld [vmem:[#allocation5 + $0x80] sm:$0xff]
    %v83 = vld [vmem:[#allocation5 + $0x88] sm:$0xff]
    %v84 = vld [vmem:[#allocation5 + $0x90] sm:$0xff]
    %v85 = vld [vmem:[#allocation5 + $0x98] sm:$0xff]
    %v86 = vld [vmem:[#allocation5 + $0xa0] sm:$0xff]
    %v87 = vld [vmem:[#allocation5 + $0xa8] sm:$0xff]
    %v88 = vld [vmem:[#allocation5 + $0xb0] sm:$0xff]
    %v89 = vld [vmem:[#allocation5 + $0xb8] sm:$0xff]
    %v90 = vld [vmem:[#allocation5 + $0xc0] sm:$0xff]
    %v91 = vld [vmem:[#allocation5 + $0xc8] sm:$0xff]
    %v92 = vld [vmem:[#allocation5 + $0xd0] sm:$0xff]
    %v93 = vld [vmem:[#allocation5 + $0xd8] sm:$0xff]
    %v94 = vld [vmem:[#allocation5 + $0xe0] sm:$0xff]
    %v95 = vld [vmem:[#allocation5 + $0xe8] sm:$0xff]
    %v96 = vld [vmem:[#allocation5 + $0xf0] sm:$0xff]
    %v97 = vld [vmem:[#allocation5 + $0xf8] sm:$0xff]
    %v98 = vld [vmem:[%s2] sm:$0x3]
    %v100 = vlaneseq
    %v101 = vshrl.u32 %v100, 7
    %v102 = vsub.s32 0, %v101
    %v103 = vrot.slane %v98, %v102
    %v104 = vlaneseq
    %v105 = vshrl.u32 %v104, 7
    %v106 = vsub.s32 1, %v105
    %v107 = vrot.slane %v98, %v106
    %110 = vmatprep.subr.mxu0 %v67
    %111 = vmatpush1.msra.mxu0 %v66
    %112 = vmatprep.subr.mxu0 %v69
    %113 = vmatpush1.msra.mxu0 %v68
    %114 = vmatprep.subr.mxu0 %v71
    %115 = vmatpush1.msra.mxu0 %v70
    %116 = vmatprep.subr.mxu0 %v73
    %117 = vmatpush1.msra.mxu0 %v72
    %118 = vmatprep.subr.mxu0 %v75
    %119 = vmatpush1.msra.mxu0 %v74
    %120 = vmatprep.subr.mxu0 %v77
    %121 = vmatpush1.msra.mxu0 %v76
    %122 = vmatprep.subr.mxu0 %v79
    %123 = vmatpush1.msra.mxu0 %v78
    %124 = vmatprep.subr.mxu0 %v81
    %125 = vmatpush1.msra.mxu0 %v80
    %126 = vmatprep.subr.mxu0 %v83
    %127 = vmatpush1.msra.mxu0 %v82
    %128 = vmatprep.subr.mxu0 %v85
    %129 = vmatpush1.msra.mxu0 %v84
    %130 = vmatprep.subr.mxu0 %v87
    %131 = vmatpush1.msra.mxu0 %v86
    %132 = vmatprep.subr.mxu0 %v89
    %133 = vmatpush1.msra.mxu0 %v88
    %134 = vmatprep.subr.mxu0 %v91
    %135 = vmatpush1.msra.mxu0 %v90
    %136 = vmatprep.subr.mxu0 %v93
    %137 = vmatpush1.msra.mxu0 %v92
    %138 = vmatprep.subr.mxu0 %v95
    %139 = vmatpush1.msra.mxu0 %v94
    %140 = vmatprep.subr.mxu0 %v97
    %141 = vmatpush1.msra.mxu0 %v96
    %142 = vmatprep.subr.mxu0 0.0
    %143 = vmatpush1.msra.mxu0 0.0
    %144 = vmatprep.subr.mxu0 0.0
    %145 = vmatpush1.msra.mxu0 0.0
    %146 = vmatprep.subr.mxu0 0.0
    %147 = vmatpush1.msra.mxu0 0.0
    %148 = vmatprep.subr.mxu0 0.0
    %149 = vmatpush1.msra.mxu0 0.0
    %150 = vmatprep.subr.mxu0 0.0
    %151 = vmatpush1.msra.mxu0 0.0
    %152 = vmatprep.subr.mxu0 0.0
    %153 = vmatpush1.msra.mxu0 0.0
    %154 = vmatprep.subr.mxu0 0.0
    %155 = vmatpush1.msra.mxu0 0.0
    %156 = vmatprep.subr.mxu0 0.0
    %157 = vmatpush1.msra.mxu0 0.0
    %158 = vmatprep.subr.mxu0 0.0
    %159 = vmatpush1.msra.mxu0 0.0
    %160 = vmatprep.subr.mxu0 0.0
    %161 = vmatpush1.msra.mxu0 0.0
    %162 = vmatprep.subr.mxu0 0.0
    %163 = vmatpush1.msra.mxu0 0.0
    %164 = vmatprep.subr.mxu0 0.0
    %165 = vmatpush1.msra.mxu0 0.0
    %166 = vmatprep.subr.mxu0 0.0
    %167 = vmatpush1.msra.mxu0 0.0
    %168 = vmatprep.subr.mxu0 0.0
    %169 = vmatpush1.msra.mxu0 0.0
    %170 = vmatprep.subr.mxu0 0.0
    %171 = vmatpush1.msra.mxu0 0.0
    %172 = vmatprep.subr.mxu0 0.0
    %173 = vmatpush1.msra.mxu0 0.0
    %174 = vmatprep.mubr.f32.mxu0 0.0
    %175 = vmatmul.mubr.f32.gmra.mrb[0].mxu0 %v62
    %v176 = vpop.f32.mrb[0].mxu0
    %v177 = vadd.f32 %v103, %v176
    %v178 = vpop.f32.mrb[0].mxu0
    %v179 = vadd.f32 %v107, %v178
    %180 = vmatprep.mubr.f32.mxu0 0.0
    %181 = vmatmul.mubr.f32.gmra.mrb[0].mxu0 %v63
    %v182 = vpop.f32.mrb[0].mxu0
    %v183 = vadd.f32 %v103, %v182
    %v184 = vpop.f32.mrb[0].mxu0
    %v185 = vadd.f32 %v107, %v184
    %186 = vmatprep.mubr.f32.mxu0 0.0
    %187 = vmatmul.mubr.f32.gmra.mrb[0].mxu0 %v64
    %v188 = vpop.f32.mrb[0].mxu0
    %v189 = vadd.f32 %v103, %v188
    %v190 = vpop.f32.mrb[0].mxu0
    %v191 = vadd.f32 %v107, %v190
    %192 = vmatprep.mubr.f32.mxu0 0.0
    %193 = vmatmul.mubr.f32.gmra.mrb[0].mxu0 %v65
    %v194 = vpop.f32.mrb[0].mxu0
    %v195 = vadd.f32 %v103, %v194
    %v196 = vpop.f32.mrb[0].mxu0
    %v197 = vadd.f32 %v107, %v196
    %198 = vdwg.mxu0
    %v199 = vmul.f32 %v177, 0.5
    %v200 = vmul.f32 %v179, 0.5
    %v201 = vmul.f32 %v183, 0.5
    %v202 = vmul.f32 %v185, 0.5
    %v203 = vmul.f32 %v189, 0.5
    %v204 = vmul.f32 %v191, 0.5
    %v205 = vmul.f32 %v195, 0.5
    %v206 = vmul.f32 %v197, 0.5
    %v207 = vmul.f32 %v177, 0.044715
    %v208 = vmul.f32 %v179, 0.044715
    %v209 = vmul.f32 %v183, 0.044715
    %v210 = vmul.f32 %v185, 0.044715
    %v211 = vmul.f32 %v189, 0.044715
    %v212 = vmul.f32 %v191, 0.044715
    %v213 = vmul.f32 %v195, 0.044715
    %v214 = vmul.f32 %v197, 0.044715
    %v215 = vmul.f32 %v207, %v177
    %v216 = vmul.f32 %v208, %v179
    %v217 = vmul.f32 %v209, %v183
    %v218 = vmul.f32 %v210, %v185
    %v219 = vmul.f32 %v211, %v189
    %v220 = vmul.f32 %v212, %v191
    %v221 = vmul.f32 %v213, %v195
    %v222 = vmul.f32 %v214, %v197
    %v223 = vmul.f32 %v215, %v177
    %v224 = vmul.f32 %v216, %v179
    %v225 = vmul.f32 %v217, %v183
    %v226 = vmul.f32 %v218, %v185
    %v227 = vmul.f32 %v219, %v189
    %v228 = vmul.f32 %v220, %v191
    %v229 = vmul.f32 %v221, %v195
    %v230 = vmul.f32 %v222, %v197
    %v231 = vadd.f32 %v177, %v223
    %v232 = vadd.f32 %v179, %v224
    %v233 = vadd.f32 %v183, %v225
    %v234 = vadd.f32 %v185, %v226
    %v235 = vadd.f32 %v189, %v227
    %v236 = vadd.f32 %v191, %v228
    %v237 = vadd.f32 %v195, %v229
    %v238 = vadd.f32 %v197, %v230
    %v239 = vmul.f32 %v231, 0.7978845
    %v240 = vmul.f32 %v232, 0.7978845
    %v241 = vmul.f32 %v233, 0.7978845
    %v242 = vmul.f32 %v234, 0.7978845
    %v243 = vmul.f32 %v235, 0.7978845
    %v244 = vmul.f32 %v236, 0.7978845
    %v245 = vmul.f32 %v237, 0.7978845
    %v246 = vmul.f32 %v238, 0.7978845
    %v247 = vtanh.pop %v239
    %v248 = vtanh.pop %v240
    %v249 = vtanh.pop %v241
    %v250 = vtanh.pop %v242
    %v251 = vtanh.pop %v243
    %v252 = vtanh.pop %v244
    %v253 = vtanh.pop %v245
    %v254 = vtanh.pop %v246
    %v255 = vadd.f32 %v247, 1.0
    %v256 = vadd.f32 %v248, 1.0
    %v257 = vadd.f32 %v249, 1.0
    %v258 = vadd.f32 %v250, 1.0
    %v259 = vadd.f32 %v251, 1.0
    %v260 = vadd.f32 %v252, 1.0
    %v261 = vadd.f32 %v253, 1.0
    %v262 = vadd.f32 %v254, 1.0
    %v263 = vmul.f32 %v199, %v255
    %v264 = vmul.f32 %v200, %v256
    %v265 = vmul.f32 %v201, %v257
    %v266 = vmul.f32 %v202, %v258
    %v267 = vmul.f32 %v203, %v259
    %v268 = vmul.f32 %v204, %v260
    %v269 = vmul.f32 %v205, %v261
    %v270 = vmul.f32 %v206, %v262
    %v271 = vld [vmem:[#allocation7] sm:$0xff]
    %v272 = vld [vmem:[#allocation7 + $0x8] sm:$0xff]
    %v273 = vld [vmem:[#allocation7 + $0x10] sm:$0xff]
    %v274 = vld [vmem:[#allocation7 + $0x18] sm:$0xff]
    %v275 = vld [vmem:[#allocation7 + $0x20] sm:$0xff]
    %v276 = vld [vmem:[#allocation7 + $0x28] sm:$0xff]
    %v277 = vld [vmem:[#allocation7 + $0x30] sm:$0xff]
    %v278 = vld [vmem:[#allocation7 + $0x38] sm:$0xff]
    %v279 = vld [vmem:[#allocation7 + $0x40] sm:$0xff]
    %v280 = vld [vmem:[#allocation7 + $0x48] sm:$0xff]
    %v281 = vld [vmem:[#allocation7 + $0x50] sm:$0xff]
    %v282 = vld [vmem:[#allocation7 + $0x58] sm:$0xff]
    %v283 = vld [vmem:[#allocation7 + $0x60] sm:$0xff]
    %v284 = vld [vmem:[#allocation7 + $0x68] sm:$0xff]
    %v285 = vld [vmem:[#allocation7 + $0x70] sm:$0xff]
    %v286 = vld [vmem:[#allocation7 + $0x78] sm:$0xff]
    %v287 = vld [vmem:[#allocation7 + $0x80] sm:$0xff]
    %v288 = vld [vmem:[#allocation7 + $0x88] sm:$0xff]
    %v289 = vld [vmem:[#allocation7 + $0x90] sm:$0xff]
    %v290 = vld [vmem:[#allocation7 + $0x98] sm:$0xff]
    %v291 = vld [vmem:[#allocation7 + $0xa0] sm:$0xff]
    %v292 = vld [vmem:[#allocation7 + $0xa8] sm:$0xff]
    %v293 = vld [vmem:[#allocation7 + $0xb0] sm:$0xff]
    %v294 = vld [vmem:[#allocation7 + $0xb8] sm:$0xff]
    %v295 = vld [vmem:[#allocation7 + $0xc0] sm:$0xff]
    %v296 = vld [vmem:[#allocation7 + $0xc8] sm:$0xff]
    %v297 = vld [vmem:[#allocation7 + $0xd0] sm:$0xff]
    %v298 = vld [vmem:[#allocation7 + $0xd8] sm:$0xff]
    %v299 = vld [vmem:[#allocation7 + $0xe0] sm:$0xff]
    %v300 = vld [vmem:[#allocation7 + $0xe8] sm:$0xff]
    %v301 = vld [vmem:[#allocation7 + $0xf0] sm:$0xff]
    %v302 = vld [vmem:[#allocation7 + $0xf8] sm:$0xff]
    %v303 = vld [vmem:[%s4] sm:$0x1]
    %v305 = vlaneseq
    %v306 = vshrl.u32 %v305, 7
    %v307 = vsub.s32 0, %v306
    %v308 = vrot.slane %v303, %v307
    %310 = vmatprep.subr.mxu0 0.0
    %311 = vmatpush1.msra.mxu0 %v271
    %312 = vmatprep.subr.mxu0 0.0
    %313 = vmatpush1.msra.mxu0 %v272
    %314 = vmatprep.subr.mxu0 0.0
    %315 = vmatpush1.msra.mxu0 %v273
    %316 = vmatprep.subr.mxu0 0.0
    %317 = vmatpush1.msra.mxu0 %v274
    %318 = vmatprep.subr.mxu0 0.0
    %319 = vmatpush1.msra.mxu0 %v275
    %320 = vmatprep.subr.mxu0 0.0
    %321 = vmatpush1.msra.mxu0 %v276
    %322 = vmatprep.subr.mxu0 0.0
    %323 = vmatpush1.msra.mxu0 %v277
    %324 = vmatprep.subr.mxu0 0.0
    %325 = vmatpush1.msra.mxu0 %v278
    %326 = vmatprep.subr.mxu0 0.0
    %327 = vmatpush1.msra.mxu0 %v279
    %328 = vmatprep.subr.mxu0 0.0
    %329 = vmatpush1.msra.mxu0 %v280
    %330 = vmatprep.subr.mxu0 0.0
    %331 = vmatpush1.msra.mxu0 %v281
    %332 = vmatprep.subr.mxu0 0.0
    %333 = vmatpush1.msra.mxu0 %v282
    %334 = vmatprep.subr.mxu0 0.0
    %335 = vmatpush1.msra.mxu0 %v283
    %336 = vmatprep.subr.mxu0 0.0
    %337 = vmatpush1.msra.mxu0 %v284
    %338 = vmatprep.subr.mxu0 0.0
    %339 = vmatpush1.msra.mxu0 %v285
    %340 = vmatprep.subr.mxu0 0.0
    %341 = vmatpush1.msra.mxu0 %v286
    %342 = vmatprep.subr.mxu0 0.0
    %343 = vmatpush1.msra.mxu0 %v287
    %344 = vmatprep.subr.mxu0 0.0
    %345 = vmatpush1.msra.mxu0 %v288
    %346 = vmatprep.subr.mxu0 0.0
    %347 = vmatpush1.msra.mxu0 %v289
    %348 = vmatprep.subr.mxu0 0.0
    %349 = vmatpush1.msra.mxu0 %v290
    %350 = vmatprep.subr.mxu0 0.0
    %351 = vmatpush1.msra.mxu0 %v291
    %352 = vmatprep.subr.mxu0 0.0
    %353 = vmatpush1.msra.mxu0 %v292
    %354 = vmatprep.subr.mxu0 0.0
    %355 = vmatpush1.msra.mxu0 %v293
    %356 = vmatprep.subr.mxu0 0.0
    %357 = vmatpush1.msra.mxu0 %v294
    %358 = vmatprep.subr.mxu0 0.0
    %359 = vmatpush1.msra.mxu0 %v295
    %360 = vmatprep.subr.mxu0 0.0
    %361 = vmatpush1.msra.mxu0 %v296
    %362 = vmatprep.subr.mxu0 0.0
    %363 = vmatpush1.msra.mxu0 %v297
    %364 = vmatprep.subr.mxu0 0.0
    %365 = vmatpush1.msra.mxu0 %v298
    %366 = vmatprep.subr.mxu0 0.0
    %367 = vmatpush1.msra.mxu0 %v299
    %368 = vmatprep.subr.mxu0 0.0
    %369 = vmatpush1.msra.mxu0 %v300
    %370 = vmatprep.subr.mxu0 0.0
    %371 = vmatpush1.msra.mxu0 %v301
    %372 = vmatprep.subr.mxu0 0.0
    %373 = vmatpush1.msra.mxu0 %v302
    %374 = vmatprep.mubr.f32.mxu0 %v264
    %375 = vmatmul.mubr.f32.gmra.mrb[0].mxu0 %v263
    %v376 = vpop.f32.mrb[0].mxu0
    %v377 = vadd.f32 %v308, %v376
    %v378 = vpop.f32.mrb[0].mxu0
    %379 = vmatprep.mubr.f32.mxu0 %v266
    %380 = vmatmul.mubr.f32.gmra.mrb[0].mxu0 %v265
    %v381 = vpop.f32.mrb[0].mxu0
    %v382 = vadd.f32 %v308, %v381
    %v383 = vpop.f32.mrb[0].mxu0
    %384 = vmatprep.mubr.f32.mxu0 %v268
    %385 = vmatmul.mubr.f32.gmra.mrb[0].mxu0 %v267
    %v386 = vpop.f32.mrb[0].mxu0
    %v387 = vadd.f32 %v308, %v386
    %v388 = vpop.f32.mrb[0].mxu0
    %389 = vmatprep.mubr.f32.mxu0 %v270
    %390 = vmatmul.mubr.f32.gmra.mrb[0].mxu0 %v269
    %v391 = vpop.f32.mrb[0].mxu0
    %v392 = vadd.f32 %v308, %v391
    %v393 = vpop.f32.mrb[0].mxu0
    %394 = vdwg.mxu0
    %v395 = vadd.f32 %v377, %v62
    %v396 = vadd.f32 %v382, %v63
    %v397 = vadd.f32 %v387, %v64
    %v398 = vadd.f32 %v392, %v65
    %399 = vst [vmem:[#allocation8] sm:$0xff] %v395
    %400 = vst [vmem:[#allocation8 + $0x8] sm:$0xff] %v396
    %401 = vst [vmem:[#allocation8 + $0x10] sm:$0xff] %v397
    %402 = vst [vmem:[#allocation8 + $0x18] sm:$0xff] %v398
    // Predicated region
    $region34: #{tpu_custom_call.1} parent=1 // pred_check
      _
    $region35: #{tpu_custom_call.1} parent=1 // pred_check_branch
      %404 = sbr.rel (0) target = $region37
    $region36: #{tpu_custom_call.1} parent=1 // pred_region
      %s406 = ssub.s32 512, 512
      %407 = vsyncadd [#allocation4], %s406
      %s408 = sshll.u32 [#allocation8], 4
      %s409 = int_to_ptr.vmem [resolvable:$true] %s408
      %414 = dma.vmem_to_hbm [thread:$0]  %s409, 512, %s5, [#allocation4], 128, 128, 8
    $region37: #{tpu_custom_call.1} parent=1 // pred_fallthru
      _
    // Predicated region
    $region38: #{tpu_custom_call.1} parent=1 // pred_check
      _
    $region39: #{tpu_custom_call.1} parent=1 // pred_check_branch
      %416 = sbr.rel (0) target = $region41
    $region40: #{tpu_custom_call.1} parent=1 // pred_region
      %417 = dma.done [#allocation4], 512
    $region41: #{tpu_custom_call.1} parent=1 // pred_fallthru
      _
    %418 = vsyncpa [#allocation3], 1
    %419 = vsyncpa [#allocation6], 1
    %420 = vsyncpa [#allocation4], 1

// kernel: tpu_custom_call.1
$region0: #{tpu_custom_call.1}
  #allocation0 [shape = 'u32[]', space=smem, size = 0x4, offset = 0x4, fixed_abs, tag = 'smem constant byte address 0x4 - core index']
  #allocation1 [shape = 'u32[144,128]{1,0:T(1,128)}', space=vmem, size = 0x12000, scoped, tag = 'internal scratch']
  %s0 = inlined_call_operand.hbm [shape: f32[32,128], index: 0, kind: input, shape index: {}]
  %s1 = inlined_call_operand.hbm [shape: f32[128,256], index: 1, kind: input, shape index: {}]
  %s2 = inlined_call_operand.vmem [shape: f32[1,256], index: 2, kind: input, shape index: {}]
  %s3 = inlined_call_operand.hbm [shape: f32[256,128], index: 3, kind: input, shape index: {}]
  %s4 = inlined_call_operand.vmem [shape: f32[1,128], index: 4, kind: input, shape index: {}]
  %s5 = inlined_call_operand.hbm [shape: f32[32,128], index: 5, kind: output, shape index: {}]
  %s6 = sld [smem:[#allocation0]]
  $region42: #{tpu_custom_call.1} parent=0
    _
  %s8 = ssub.s32 1, %s6
  %s9 = scalar_select 0, %s8, %s6
  $region1: #{tpu_custom_call.1} parent=0
    #allocation2 [shape = 'u8[16384]{0}', space=vmem, size = 0x4000, scoped, tag = 'input window, operand 0, single buffered']
    #allocation3 [shape = 's32[1]{0}', space=sflag, size = 0x4, scoped, tag = 'scoped memory for tpu_custom_call.1']
    #allocation4 [shape = 's32[1]{0}', space=sflag, size = 0x4, scoped, tag = 'scoped memory for tpu_custom_call.1']
    #allocation5 [shape = 'u8[131072]{0}', space=vmem, size = 0x20000, scoped, tag = 'input window, operand 1, single buffered']
    #allocation6 [shape = 's32[1]{0}', space=sflag, size = 0x4, scoped, tag = 'scoped memory for tpu_custom_call.1']
    #allocation7 [shape = 'u8[131072]{0}', space=vmem, size = 0x20000, scoped, tag = 'input window, operand 3, single buffered']
    #allocation8 [shape = 'u8[16384]{0}', space=vmem, size = 0x4000, scoped, tag = 'output window, operand 0, single buffered']
    %10 = vsyncpa [#allocation3], 0
    %11 = vsyncpa [#allocation6], 0
    %12 = vsyncpa [#allocation4], 0
    // Predicated region
    $region2: #{tpu_custom_call.1} parent=1 // pred_check
      _
    $region3: #{tpu_custom_call.1} parent=1 // pred_check_branch
      %14 = sbr.rel (0) target = $region5
    $region4: #{tpu_custom_call.1} parent=1 // pred_region
      %s16 = ssub.s32 512, 512
      %17 = vsyncadd [#allocation3], %s16
      %s18 = sshll.u32 [#allocation2], 4
      %s19 = int_to_ptr.vmem [resolvable:$true] %s18
      %24 = dma.hbm_to_vmem [thread:$0]  %s0, 512, %s19, [#allocation3], 128, 128, 8
    $region5: #{tpu_custom_call.1} parent=1 // pred_fallthru
      _
    // Predicated region
    $region6: #{tpu_custom_call.1} parent=1 // pred_check
      _
    $region7: #{tpu_custom_call.1} parent=1 // pred_check_branch
      %26 = sbr.rel (0) target = $region9
    $region8: #{tpu_custom_call.1} parent=1 // pred_region
      %s28 = ssub.s32 4096, 4096
      %29 = vsyncadd [#allocation6], %s28
      %s30 = sshll.u32 [#allocation5], 4
      %s31 = int_to_ptr.vmem [resolvable:$true] %s30
      %36 = dma.hbm_to_vmem [thread:$0]  %s1, 4096, %s31, [#allocation6], 256, 256, 16
    $region9: #{tpu_custom_call.1} parent=1 // pred_fallthru
      _
    // Predicated region
    $region10: #{tpu_custom_call.1} parent=1 // pred_check
      _
    $region11: #{tpu_custom_call.1} parent=1 // pred_check_branch
      %38 = sbr.rel (0) target = $region13
    $region12: #{tpu_custom_call.1} parent=1 // pred_region
      _
    $region13: #{tpu_custom_call.1} parent=1 // pred_fallthru
      _
    // Predicated region
    $region14: #{tpu_custom_call.1} parent=1 // pred_check
      _
    $region15: #{tpu_custom_call.1} parent=1 // pred_check_branch
      %40 = sbr.rel (0) target = $region17
    $region16: #{tpu_custom_call.1} parent=1 // pred_region
      %s42 = ssub.s32 4096, 4096
      %43 = vsyncadd [#allocation6], %s42
      %s44 = sshll.u32 [#allocation7], 4
      %s45 = int_to_ptr.vmem [resolvable:$true] %s44
      %50 = dma.hbm_to_vmem [thread:$0]  %s3, 4096, %s45, [#allocation6], 128, 128, 8
    $region17: #{tpu_custom_call.1} parent=1 // pred_fallthru
      _
    // Predicated region
    $region18: #{tpu_custom_call.1} parent=1 // pred_check
      _
    $region19: #{tpu_custom_call.1} parent=1 // pred_check_branch
      %52 = sbr.rel (0) target = $region21
    $region20: #{tpu_custom_call.1} parent=1 // pred_region
      _
    $region21: #{tpu_custom_call.1} parent=1 // pred_fallthru
      _
    // Predicated region
    $region22: #{tpu_custom_call.1} parent=1 // pred_check
      _
    $region23: #{tpu_custom_call.1} parent=1 // pred_check_branch
      %54 = sbr.rel (0) target = $region25
    $region24: #{tpu_custom_call.1} parent=1 // pred_region
      %55 = dma.done [#allocation3], 512
    $region25: #{tpu_custom_call.1} parent=1 // pred_fallthru
      _
    // Predicated region
    $region26: #{tpu_custom_call.1} parent=1 // pred_check
      _
    $region27: #{tpu_custom_call.1} parent=1 // pred_check_branch
      %57 = sbr.rel (0) target = $region29
    $region28: #{tpu_custom_call.1} parent=1 // pred_region
      %58 = dma.done [#allocation6], 4096
    $region29: #{tpu_custom_call.1} parent=1 // pred_fallthru
      _
    // Predicated region
    $region30: #{tpu_custom_call.1} parent=1 // pred_check
      _
    $region31: #{tpu_custom_call.1} parent=1 // pred_check_branch
      %60 = sbr.rel (0) target = $region33
    $region32: #{tpu_custom_call.1} parent=1 // pred_region
      %61 = dma.done [#allocation6], 4096
    $region33: #{tpu_custom_call.1} parent=1 // pred_fallthru
      _
    %v62 = vld [vmem:[#allocation2] sm:$0xff]
    %v63 = vld [vmem:[#allocation2 + $0x8] sm:$0xff]
    %v64 = vld [vmem:[#allocation2 + $0x10] sm:$0xff]
    %v65 = vld [vmem:[#allocation2 + $0x18] sm:$0xff]
    %v66 = vld [vmem:[#allocation5] sm:$0xff]
    %v67 = vld [vmem:[#allocation5 + $0x8] sm:$0xff]
    %v68 = vld [vmem:[#allocation5 + $0x10] sm:$0xff]
    %v69 = vld [vmem:[#allocation5 + $0x18] sm:$0xff]
    %v70 = vld [vmem:[#allocation5 + $0x20] sm:$0xff]
    %v71 = vld [vmem:[#allocation5 + $0x28] sm:$0xff]
    %v72 = vld [vmem:[#allocation5 + $0x30] sm:$0xff]
    %v73 = vld [vmem:[#allocation5 + $0x38] sm:$0xff]
    %v74 = vld [vmem:[#allocation5 + $0x40] sm:$0xff]
    %v75 = vld [vmem:[#allocation5 + $0x48] sm:$0xff]
    %v76 = vld [vmem:[#allocation5 + $0x50] sm:$0xff]
    %v77 = vld [vmem:[#allocation5 + $0x58] sm:$0xff]
    %v78 = vld [vmem:[#allocation5 + $0x60] sm:$0xff]
    %v79 = vld [vmem:[#allocation5 + $0x68] sm:$0xff]
    %v80 = vld [vmem:[#allocation5 + $0x70] sm:$0xff]
    %v81 = vld [vmem:[#allocation5 + $0x78] sm:$0xff]
    %v82 = vld [vmem:[#allocation5 + $0x80] sm:$0xff]
    %v83 = vld [vmem:[#allocation5 + $0x88] sm:$0xff]
    %v84 = vld [vmem:[#allocation5 + $0x90] sm:$0xff]
    %v85 = vld [vmem:[#allocation5 + $0x98] sm:$0xff]
    %v86 = vld [vmem:[#allocation5 + $0xa0] sm:$0xff]
    %v87 = vld [vmem:[#allocation5 + $0xa8] sm:$0xff]
    %v88 = vld [vmem:[#allocation5 + $0xb0] sm:$0xff]
    %v89 = vld [vmem:[#allocation5 + $0xb8] sm:$0xff]
    %v90 = vld [vmem:[#allocation5 + $0xc0] sm:$0xff]
    %v91 = vld [vmem:[#allocation5 + $0xc8] sm:$0xff]
    %v92 = vld [vmem:[#allocation5 + $0xd0] sm:$0xff]
    %v93 = vld [vmem:[#allocation5 + $0xd8] sm:$0xff]
    %v94 = vld [vmem:[#allocation5 + $0xe0] sm:$0xff]
    %v95 = vld [vmem:[#allocation5 + $0xe8] sm:$0xff]
    %v96 = vld [vmem:[#allocation5 + $0xf0] sm:$0xff]
    %v97 = vld [vmem:[#allocation5 + $0xf8] sm:$0xff]
    %v98 = vld [vmem:[%s2] sm:$0x3]
    %v100 = vlaneseq
    %v101 = vshrl.u32 %v100, 7
    %v102 = vsub.s32 0, %v101
    %v103 = vrot.slane %v98, %v102
    %v104 = vlaneseq
    %v105 = vshrl.u32 %v104, 7
    %v106 = vsub.s32 1, %v105
    %v107 = vrot.slane %v98, %v106
    %110 = vmatprep.subr.mxu0 %v67
    %111 = vmatpush1.msra.mxu0 %v66
    %112 = vmatprep.subr.mxu0 %v69
    %113 = vmatpush1.msra.mxu0 %v68
    %114 = vmatprep.subr.mxu0 %v71
    %115 = vmatpush1.msra.mxu0 %v70
    %116 = vmatprep.subr.mxu0 %v73
    %117 = vmatpush1.msra.mxu0 %v72
    %118 = vmatprep.subr.mxu0 %v75
    %119 = vmatpush1.msra.mxu0 %v74
    %120 = vmatprep.subr.mxu0 %v77
    %121 = vmatpush1.msra.mxu0 %v76
    %122 = vmatprep.subr.mxu0 %v79
    %123 = vmatpush1.msra.mxu0 %v78
    %124 = vmatprep.subr.mxu0 %v81
    %125 = vmatpush1.msra.mxu0 %v80
    %126 = vmatprep.subr.mxu0 %v83
    %127 = vmatpush1.msra.mxu0 %v82
    %128 = vmatprep.subr.mxu0 %v85
    %129 = vmatpush1.msra.mxu0 %v84
    %130 = vmatprep.subr.mxu0 %v87
    %131 = vmatpush1.msra.mxu0 %v86
    %132 = vmatprep.subr.mxu0 %v89
    %133 = vmatpush1.msra.mxu0 %v88
    %134 = vmatprep.subr.mxu0 %v91
    %135 = vmatpush1.msra.mxu0 %v90
    %136 = vmatprep.subr.mxu0 %v93
    %137 = vmatpush1.msra.mxu0 %v92
    %138 = vmatprep.subr.mxu0 %v95
    %139 = vmatpush1.msra.mxu0 %v94
    %140 = vmatprep.subr.mxu0 %v97
    %141 = vmatpush1.msra.mxu0 %v96
    %142 = vmatprep.subr.mxu0 0.0
    %143 = vmatpush1.msra.mxu0 0.0
    %144 = vmatprep.subr.mxu0 0.0
    %145 = vmatpush1.msra.mxu0 0.0
    %146 = vmatprep.subr.mxu0 0.0
    %147 = vmatpush1.msra.mxu0 0.0
    %148 = vmatprep.subr.mxu0 0.0
    %149 = vmatpush1.msra.mxu0 0.0
    %150 = vmatprep.subr.mxu0 0.0
    %151 = vmatpush1.msra.mxu0 0.0
    %152 = vmatprep.subr.mxu0 0.0
    %153 = vmatpush1.msra.mxu0 0.0
    %154 = vmatprep.subr.mxu0 0.0
    %155 = vmatpush1.msra.mxu0 0.0
    %156 = vmatprep.subr.mxu0 0.0
    %157 = vmatpush1.msra.mxu0 0.0
    %158 = vmatprep.subr.mxu0 0.0
    %159 = vmatpush1.msra.mxu0 0.0
    %160 = vmatprep.subr.mxu0 0.0
    %161 = vmatpush1.msra.mxu0 0.0
    %162 = vmatprep.subr.mxu0 0.0
    %163 = vmatpush1.msra.mxu0 0.0
    %164 = vmatprep.subr.mxu0 0.0
    %165 = vmatpush1.msra.mxu0 0.0
    %166 = vmatprep.subr.mxu0 0.0
    %167 = vmatpush1.msra.mxu0 0.0
    %168 = vmatprep.subr.mxu0 0.0
    %169 = vmatpush1.msra.mxu0 0.0
    %170 = vmatprep.subr.mxu0 0.0
    %171 = vmatpush1.msra.mxu0 0.0
    %172 = vmatprep.subr.mxu0 0.0
    %173 = vmatpush1.msra.mxu0 0.0
    %174 = vmatprep.mubr.f32.mxu0 0.0
    %175 = vmatmul.mubr.f32.gmra.mrb[0].mxu0 %v62
    %v176 = vpop.f32.mrb[0].mxu0
    %v177 = vadd.f32 %v103, %v176
    %v178 = vpop.f32.mrb[0].mxu0
    %v179 = vadd.f32 %v107, %v178
    %180 = vmatprep.mubr.f32.mxu0 0.0
    %181 = vmatmul.mubr.f32.gmra.mrb[0].mxu0 %v63
    %v182 = vpop.f32.mrb[0].mxu0
    %v183 = vadd.f32 %v103, %v182
    %v184 = vpop.f32.mrb[0].mxu0
    %v185 = vadd.f32 %v107, %v184
    %186 = vmatprep.mubr.f32.mxu0 0.0
    %187 = vmatmul.mubr.f32.gmra.mrb[0].mxu0 %v64
    %v188 = vpop.f32.mrb[0].mxu0
    %v189 = vadd.f32 %v103, %v188
    %v190 = vpop.f32.mrb[0].mxu0
    %v191 = vadd.f32 %v107, %v190
    %192 = vmatprep.mubr.f32.mxu0 0.0
    %193 = vmatmul.mubr.f32.gmra.mrb[0].mxu0 %v65
    %v194 = vpop.f32.mrb[0].mxu0
    %v195 = vadd.f32 %v103, %v194
    %v196 = vpop.f32.mrb[0].mxu0
    %v197 = vadd.f32 %v107, %v196
    %198 = vdwg.mxu0
    %v199 = vmul.f32 %v177, 0.5
    %v200 = vmul.f32 %v179, 0.5
    %v201 = vmul.f32 %v183, 0.5
    %v202 = vmul.f32 %v185, 0.5
    %v203 = vmul.f32 %v189, 0.5
    %v204 = vmul.f32 %v191, 0.5
    %v205 = vmul.f32 %v195, 0.5
    %v206 = vmul.f32 %v197, 0.5
    %v207 = vmul.f32 %v177, 0.044715
    %v208 = vmul.f32 %v179, 0.044715
    %v209 = vmul.f32 %v183, 0.044715
    %v210 = vmul.f32 %v185, 0.044715
    %v211 = vmul.f32 %v189, 0.044715
    %v212 = vmul.f32 %v191, 0.044715
    %v213 = vmul.f32 %v195, 0.044715
    %v214 = vmul.f32 %v197, 0.044715
    %v215 = vmul.f32 %v207, %v177
    %v216 = vmul.f32 %v208, %v179
    %v217 = vmul.f32 %v209, %v183
    %v218 = vmul.f32 %v210, %v185
    %v219 = vmul.f32 %v211, %v189
    %v220 = vmul.f32 %v212, %v191
    %v221 = vmul.f32 %v213, %v195
    %v222 = vmul.f32 %v214, %v197
    %v223 = vmul.f32 %v215, %v177
    %v224 = vmul.f32 %v216, %v179
    %v225 = vmul.f32 %v217, %v183
    %v226 = vmul.f32 %v218, %v185
    %v227 = vmul.f32 %v219, %v189
    %v228 = vmul.f32 %v220, %v191
    %v229 = vmul.f32 %v221, %v195
    %v230 = vmul.f32 %v222, %v197
    %v231 = vadd.f32 %v177, %v223
    %v232 = vadd.f32 %v179, %v224
    %v233 = vadd.f32 %v183, %v225
    %v234 = vadd.f32 %v185, %v226
    %v235 = vadd.f32 %v189, %v227
    %v236 = vadd.f32 %v191, %v228
    %v237 = vadd.f32 %v195, %v229
    %v238 = vadd.f32 %v197, %v230
    %v239 = vmul.f32 %v231, 0.7978845
    %v240 = vmul.f32 %v232, 0.7978845
    %v241 = vmul.f32 %v233, 0.7978845
    %v242 = vmul.f32 %v234, 0.7978845
    %v243 = vmul.f32 %v235, 0.7978845
    %v244 = vmul.f32 %v236, 0.7978845
    %v245 = vmul.f32 %v237, 0.7978845
    %v246 = vmul.f32 %v238, 0.7978845
    %v247 = vtanh.pop %v239
    %v248 = vtanh.pop %v240
    %v249 = vtanh.pop %v241
    %v250 = vtanh.pop %v242
    %v251 = vtanh.pop %v243
    %v252 = vtanh.pop %v244
    %v253 = vtanh.pop %v245
    %v254 = vtanh.pop %v246
    %v255 = vadd.f32 %v247, 1.0
    %v256 = vadd.f32 %v248, 1.0
    %v257 = vadd.f32 %v249, 1.0
    %v258 = vadd.f32 %v250, 1.0
    %v259 = vadd.f32 %v251, 1.0
    %v260 = vadd.f32 %v252, 1.0
    %v261 = vadd.f32 %v253, 1.0
    %v262 = vadd.f32 %v254, 1.0
    %v263 = vmul.f32 %v199, %v255
    %v264 = vmul.f32 %v200, %v256
    %v265 = vmul.f32 %v201, %v257
    %v266 = vmul.f32 %v202, %v258
    %v267 = vmul.f32 %v203, %v259
    %v268 = vmul.f32 %v204, %v260
    %v269 = vmul.f32 %v205, %v261
    %v270 = vmul.f32 %v206, %v262
    %v271 = vld [vmem:[#allocation7] sm:$0xff]
    %v272 = vld [vmem:[#allocation7 + $0x8] sm:$0xff]
    %v273 = vld [vmem:[#allocation7 + $0x10] sm:$0xff]
    %v274 = vld [vmem:[#allocation7 + $0x18] sm:$0xff]
    %v275 = vld [vmem:[#allocation7 + $0x20] sm:$0xff]
    %v276 = vld [vmem:[#allocation7 + $0x28] sm:$0xff]
    %v277 = vld [vmem:[#allocation7 + $0x30] sm:$0xff]
    %v278 = vld [vmem:[#allocation7 + $0x38] sm:$0xff]
    %v279 = vld [vmem:[#allocation7 + $0x40] sm:$0xff]
    %v280 = vld [vmem:[#allocation7 + $0x48] sm:$0xff]
    %v281 = vld [vmem:[#allocation7 + $0x50] sm:$0xff]
    %v282 = vld [vmem:[#allocation7 + $0x58] sm:$0xff]
    %v283 = vld [vmem:[#allocation7 + $0x60] sm:$0xff]
    %v284 = vld [vmem:[#allocation7 + $0x68] sm:$0xff]
    %v285 = vld [vmem:[#allocation7 + $0x70] sm:$0xff]
    %v286 = vld [vmem:[#allocation7 + $0x78] sm:$0xff]
    %v287 = vld [vmem:[#allocation7 + $0x80] sm:$0xff]
    %v288 = vld [vmem:[#allocation7 + $0x88] sm:$0xff]
    %v289 = vld [vmem:[#allocation7 + $0x90] sm:$0xff]
    %v290 = vld [vmem:[#allocation7 + $0x98] sm:$0xff]
    %v291 = vld [vmem:[#allocation7 + $0xa0] sm:$0xff]
    %v292 = vld [vmem:[#allocation7 + $0xa8] sm:$0xff]
    %v293 = vld [vmem:[#allocation7 + $0xb0] sm:$0xff]
    %v294 = vld [vmem:[#allocation7 + $0xb8] sm:$0xff]
    %v295 = vld [vmem:[#allocation7 + $0xc0] sm:$0xff]
    %v296 = vld [vmem:[#allocation7 + $0xc8] sm:$0xff]
    %v297 = vld [vmem:[#allocation7 + $0xd0] sm:$0xff]
    %v298 = vld [vmem:[#allocation7 + $0xd8] sm:$0xff]
    %v299 = vld [vmem:[#allocation7 + $0xe0] sm:$0xff]
    %v300 = vld [vmem:[#allocation7 + $0xe8] sm:$0xff]
    %v301 = vld [vmem:[#allocation7 + $0xf0] sm:$0xff]
    %v302 = vld [vmem:[#allocation7 + $0xf8] sm:$0xff]
    %v303 = vld [vmem:[%s4] sm:$0x1]
    %v305 = vlaneseq
    %v306 = vshrl.u32 %v305, 7
    %v307 = vsub.s32 0, %v306
    %v308 = vrot.slane %v303, %v307
    %310 = vmatprep.subr.mxu0 0.0
    %311 = vmatpush1.msra.mxu0 %v271
    %312 = vmatprep.subr.mxu0 0.0
    %313 = vmatpush1.msra.mxu0 %v272
    %314 = vmatprep.subr.mxu0 0.0
    %315 = vmatpush1.msra.mxu0 %v273
    %316 = vmatprep.subr.mxu0 0.0
    %317 = vmatpush1.msra.mxu0 %v274
    %318 = vmatprep.subr.mxu0 0.0
    %319 = vmatpush1.msra.mxu0 %v275
    %320 = vmatprep.subr.mxu0 0.0
    %321 = vmatpush1.msra.mxu0 %v276
    %322 = vmatprep.subr.mxu0 0.0
    %323 = vmatpush1.msra.mxu0 %v277
    %324 = vmatprep.subr.mxu0 0.0
    %325 = vmatpush1.msra.mxu0 %v278
    %326 = vmatprep.subr.mxu0 0.0
    %327 = vmatpush1.msra.mxu0 %v279
    %328 = vmatprep.subr.mxu0 0.0
    %329 = vmatpush1.msra.mxu0 %v280
    %330 = vmatprep.subr.mxu0 0.0
    %331 = vmatpush1.msra.mxu0 %v281
    %332 = vmatprep.subr.mxu0 0.0
    %333 = vmatpush1.msra.mxu0 %v282
    %334 = vmatprep.subr.mxu0 0.0
    %335 = vmatpush1.msra.mxu0 %v283
    %336 = vmatprep.subr.mxu0 0.0
    %337 = vmatpush1.msra.mxu0 %v284
    %338 = vmatprep.subr.mxu0 0.0
    %339 = vmatpush1.msra.mxu0 %v285
    %340 = vmatprep.subr.mxu0 0.0
    %341 = vmatpush1.msra.mxu0 %v286
    %342 = vmatprep.subr.mxu0 0.0
    %343 = vmatpush1.msra.mxu0 %v287
    %344 = vmatprep.subr.mxu0 0.0
    %345 = vmatpush1.msra.mxu0 %v288
    %346 = vmatprep.subr.mxu0 0.0
    %347 = vmatpush1.msra.mxu0 %v289
    %348 = vmatprep.subr.mxu0 0.0
    %349 = vmatpush1.msra.mxu0 %v290
    %350 = vmatprep.subr.mxu0 0.0
    %351 = vmatpush1.msra.mxu0 %v291
    %352 = vmatprep.subr.mxu0 0.0
    %353 = vmatpush1.msra.mxu0 %v292
    %354 = vmatprep.subr.mxu0 0.0
    %355 = vmatpush1.msra.mxu0 %v293
    %356 = vmatprep.subr.mxu0 0.0
    %357 = vmatpush1.msra.mxu0 %v294
    %358 = vmatprep.subr.mxu0 0.0
    %359 = vmatpush1.msra.mxu0 %v295
    %360 = vmatprep.subr.mxu0 0.0
    %361 = vmatpush1.msra.mxu0 %v296
    %362 = vmatprep.subr.mxu0 0.0
    %363 = vmatpush1.msra.mxu0 %v297
    %364 = vmatprep.subr.mxu0 0.0
    %365 = vmatpush1.msra.mxu0 %v298
    %366 = vmatprep.subr.mxu0 0.0
    %367 = vmatpush1.msra.mxu0 %v299
    %368 = vmatprep.subr.mxu0 0.0
    %369 = vmatpush1.msra.mxu0 %v300
    %370 = vmatprep.subr.mxu0 0.0
    %371 = vmatpush1.msra.mxu0 %v301
    %372 = vmatprep.subr.mxu0 0.0
    %373 = vmatpush1.msra.mxu0 %v302
    %374 = vmatprep.mubr.f32.mxu0 %v264
    %375 = vmatmul.mubr.f32.gmra.mrb[0].mxu0 %v263
    %v376 = vpop.f32.mrb[0].mxu0
    %v377 = vadd.f32 %v308, %v376
    %v378 = vpop.f32.mrb[0].mxu0
    %379 = vmatprep.mubr.f32.mxu0 %v266
    %380 = vmatmul.mubr.f32.gmra.mrb[0].mxu0 %v265
    %v381 = vpop.f32.mrb[0].mxu0
    %v382 = vadd.f32 %v308, %v381
    %v383 = vpop.f32.mrb[0].mxu0
    %384 = vmatprep.mubr.f32.mxu0 %v268
    %385 = vmatmul.mubr.f32.gmra.mrb[0].mxu0 %v267
    %v386 = vpop.f32.mrb[0].mxu0
    %v387 = vadd.f32 %v308, %v386
    %v388 = vpop.f32.mrb[0].mxu0
    %389 = vmatprep.mubr.f32.mxu0 %v270
    %390 = vmatmul.mubr.f32.gmra.mrb[0].mxu0 %v269
    %v391 = vpop.f32.mrb[0].mxu0
    %v392 = vadd.f32 %v308, %v391
    %v393 = vpop.f32.mrb[0].mxu0
    %394 = vdwg.mxu0
    %v395 = vadd.f32 %v377, %v62
    %v396 = vadd.f32 %v382, %v63
    %v397 = vadd.f32 %v387, %v64
    %v398 = vadd.f32 %v392, %v65
    %399 = vst [vmem:[#allocation8] sm:$0xff] %v395
    %400 = vst [vmem:[#allocation8 + $0x8] sm:$0xff] %v396
    %401 = vst [vmem:[#allocation8 + $0x10] sm:$0xff] %v397
    %402 = vst [vmem:[#allocation8 + $0x18] sm:$0xff] %v398
    // Predicated region
    $region34: #{tpu_custom_call.1} parent=1 // pred_check
      _
    $region35: #{tpu_custom_call.1} parent=1 // pred_check_branch
      %404 = sbr.rel (0) target = $region37
    $region36: #{tpu_custom_call.1} parent=1 // pred_region
      %s406 = ssub.s32 512, 512
      %407 = vsyncadd [#allocation4], %s406
      %s408 = sshll.u32 [#allocation8], 4
      %s409 = int_to_ptr.vmem [resolvable:$true] %s408
      %414 = dma.vmem_to_hbm [thread:$0]  %s409, 512, %s5, [#allocation4], 128, 128, 8
    $region37: #{tpu_custom_call.1} parent=1 // pred_fallthru
      _
    // Predicated region
    $region38: #{tpu_custom_call.1} parent=1 // pred_check
      _
    $region39: #{tpu_custom_call.1} parent=1 // pred_check_branch
      %416 = sbr.rel (0) target = $region41
    $region40: #{tpu_custom_call.1} parent=1 // pred_region
      %417 = dma.done [#allocation4], 512
    $region41: #{tpu_custom_call.1} parent=1 // pred_fallthru
      _
    %418 = vsyncpa [#allocation3], 1
    %419 = vsyncpa [#allocation6], 1
    %420 = vsyncpa [#allocation4], 1

</llo_original>
